<compile_context>
chip_gen: v7x
topology: tpu7x:2x2x1
jax: 0.10.0
libtpu: 0.0.40
codegen_flags: <defaults>
</compile_context>

<pallas_src>
import numpy as np

import jax
import jax.numpy as jnp
from jax import lax
from jax.experimental import pallas as pl
from jax.experimental.pallas import tpu as pltpu


# ----------------------------------------------------------------------------
# pltpu.roll direction probe (runs once, one-vreg kernel)
# ----------------------------------------------------------------------------
def _roll_matches_jnp() -> bool:
    """True if pltpu.roll follows jnp.roll semantics (result[i] = x[i - shift]).

    Decided once with a tiny probe kernel so the static tap-shift signs in the
    backbone kernel are always built with the correct rotation direction.
    """
    def probe(x_ref, o_ref):
        o_ref[...] = pltpu.roll(x_ref[...], 1, axis=1)

    x = lax.broadcasted_iota(jnp.float32, (8, 128), 1)
    y = pl.pallas_call(
        probe, out_shape=jax.ShapeDtypeStruct((8, 128), jnp.float32))(x)
    return int(y[0, 0]) == 127


# ----------------------------------------------------------------------------
# Pallas kernel: fused 3-layer conv backbone, whole batch in one invocation
# ----------------------------------------------------------------------------
def _make_backbone_kernel(width_hi, width_lo, roll_like_jnp):
    """Builds the fused kernel with all spatial sizes baked in statically.

    Activations are (C, B*H*W): the lane axis is the flattened (b, i, j)
    raster, so VPU ops / loads are lane-dense.  3x3 taps = lane rolls (XLU)
    masked by precomputed 0/1 validity rows; each conv is one MXU matmul.
    """

    def conv3x3(h, w_mat, bias, mask, lane_w):
        # h: (Cin, N)   mask: (9, N)   w_mat: (Cout, 9*Cin)   bias: (Cout, 1)
        n = h.shape[1]
        taps = []
        for t in range(9):
            dy, dx = t // 3 - 1, t % 3 - 1
            off = dy * lane_w + dx                    # flattened tap offset
            if off == 0:
                taps.append(h)                        # center tap, mask == 1
                continue
            shift = (-off if roll_like_jnp else off) % n
            taps.append(pltpu.roll(h, shift, axis=1) * mask[t:t + 1, :])
        col = jnp.concatenate(taps, axis=0)           # (9*Cin, N) im2col block
        out = jnp.dot(w_mat, col, preferred_element_type=jnp.float32)
        return jnp.maximum(out + bias, 0.0)           # folded-BN bias + ReLU

    def kernel(x_ref, w1_ref, w2_ref, w3_ref, b1_ref, b2_ref, b3_ref,
               mhi_ref, mlo_ref, s2_ref, s3_ref, o_ref):
        m_hi = mhi_ref[...]                           # (9, B*H*W)    masks
        m_lo = mlo_ref[...]                           # (9, B*H*W/4)
        h = x_ref[...]                                # (8, B*H*W)    input
        h = conv3x3(h, w1_ref[...], b1_ref[...], m_hi, width_hi)   # stride 1
        h = conv3x3(h, w2_ref[...], b2_ref[...], m_hi, width_hi)   # full res
        h = jnp.dot(h, s2_ref[...], preferred_element_type=jnp.float32)  # /2
        h = conv3x3(h, w3_ref[...], b3_ref[...], m_lo, width_lo)   # full res
        h = jnp.dot(h, s3_ref[...], preferred_element_type=jnp.float32)  # /2
        o_ref[...] = h.astype(o_ref.dtype)            # (C3, B*H3*W3)

    return kernel


# ----------------------------------------------------------------------------
# Host-side constants: tap-validity masks and stride-2 subsample selections
# ----------------------------------------------------------------------------
def _tap_masks(hh, ww, batch):
    """(9, batch*hh*ww) 0/1 validity of each 3x3 tap at each raster position."""
    m = np.zeros((9, hh * ww), np.float32)
    for t in range(9):
        dy, dx = t // 3 - 1, t % 3 - 1
        for i in range(hh):
            if not (0 <= i + dy < hh):
                continue
            for j in range(ww):
                if 0 <= j + dx < ww:
                    m[t, i * ww + j] = 1.0
    return np.tile(m, (1, batch))                     # b-major lane order


def _subsample_select(hh, ww, batch):
    """(batch*hh*ww, batch*hh*ww/4) 0/1 selection of even (i, j) positions."""
    ho, wo = hh // 2, ww // 2
    s = np.zeros((batch * hh * ww, batch * ho * wo), np.float32)
    for bb in range(batch):
        for i in range(ho):
            for j in range(wo):
                s[bb * hh * ww + (2 * i) * ww + 2 * j,
                  bb * ho * wo + i * wo + j] = 1.0
    return s


# ----------------------------------------------------------------------------
# ImageBackbone wrapper (deterministic synthetic backbone)
# ----------------------------------------------------------------------------
class ImageBackbonePallas:
    """Returns backbone(x).feature_maps[-1] for a small conv backbone."""

    def __init__(self, in_chans=3, widths=(16, 32, 64), seed=42):
        assert len(widths) == 3
        key = jax.random.PRNGKey(seed)
        self.in_chans = in_chans
        self.widths = tuple(widths)
        self.strides = (1, 2, 2)          # kernel structure assumes this
        self.num_features = widths[-1]
        self.cin_pad = ((in_chans + 7) // 8) * 8   # sublane-align layer-1 im2col
        self._roll_like_jnp = _roll_matches_jnp()

        self.raw_params = []              # (w_hwio, scale, bias) for reference
        self.mats = []                    # (Cout, 9*Cin) folded conv+BN weights
        self.biases = []                  # (Cout, 1)
        cin = in_chans
        for li, cout in enumerate(self.widths):
            key, kw, ks, kb = jax.random.split(key, 4)
            w = jax.random.normal(kw, (3, 3, cin, cout), jnp.float32) * (
                1.0 / jnp.sqrt(9.0 * cin))
            scale = 1.0 + 0.1 * jax.random.normal(ks, (cout,), jnp.float32)
            bias = 0.1 * jax.random.normal(kb, (cout,), jnp.float32)
            self.raw_params.append((w, scale, bias))

            # Fold BN scale into the conv weights: conv(x, w)*s + b == conv(x, w*s) + b.
            cin_k = self.cin_pad if li == 0 else cin
            wf = (w * scale[None, None, None, :]).reshape(9, cin, cout)
            if cin_k != cin:               # zero columns for the padded channels
                wf = jnp.concatenate(
                    [wf, jnp.zeros((9, cin_k - cin, cout), jnp.float32)], axis=1)
            self.mats.append(jnp.transpose(wf.reshape(9 * cin_k, cout)))
            self.biases.append(bias.reshape(cout, 1))
            cin = cout

        self._const_cache = {}

    def _constants(self, b, h, w):
        key = (b, h, w)
        if key not in self._const_cache:
            self._const_cache[key] = (
                jnp.asarray(_tap_masks(h, w, b)),
                jnp.asarray(_tap_masks(h // 2, w // 2, b)),
                jnp.asarray(_subsample_select(h, w, b)),
                jnp.asarray(_subsample_select(h // 2, w // 2, b)),
            )
        return self._const_cache[key]

    # -------------------------- Pallas forward ------------------------------
    def forward(self, x_nchw):
        b, c, h, w = x_nchw.shape
        assert c == self.in_chans
        assert h % 4 == 0 and w % 4 == 0, "two stride-2 stages need H, W % 4 == 0"
        c0 = self.cin_pad
        c1, c2, c3 = self.widths
        n1, n2, n3 = b * h * w, b * h * w // 4, b * h * w // 16
        h3, w3 = h // 4, w // 4

        # NCHW -> (C, B*H*W): lane axis = flattened (b, i, j) raster (a ~KB
        # batch<->channel transpose), channels zero-padded to a multiple of 8
        # so every im2col block in the kernel is sublane-aligned.
        x2 = jnp.transpose(x_nchw, (1, 0, 2, 3)).reshape(c, n1).astype(jnp.float32)
        if c0 > c:
            x2 = jnp.concatenate([x2, jnp.zeros((c0 - c, n1), jnp.float32)], axis=0)

        m_hi, m_lo, s2, s3 = self._constants(b, h, w)
        wm1, wm2, wm3 = self.mats
        bv1, bv2, bv3 = self.biases

        flops = 2 * (c1 * 9 * c0 * n1 + c2 * 9 * c1 * n1 + c2 * n1 * n2
                     + c3 * 9 * c2 * n2 + c3 * n2 * n3)
        bytes_accessed = 4 * (x2.size + wm1.size + wm2.size + wm3.size
                              + bv1.size + bv2.size + bv3.size
                              + m_hi.size + m_lo.size + s2.size + s3.size
                              + c3 * n3)

        # Single grid-less invocation: whole batch is folded into the lane axis,
        # so there is no serial per-image grid loop (v5e/v6e) and all constants
        # (~0.4 MB total) are fetched into VMEM exactly once.
        out = pl.pallas_call(
            _make_backbone_kernel(w, w // 2, self._roll_like_jnp),
            out_shape=jax.ShapeDtypeStruct((c3, n3), jnp.float32),
            compiler_params=pltpu.CompilerParams(
                vmem_limit_bytes=16 * 1024 * 1024),
            cost_estimate=pl.CostEstimate(
                flops=int(flops), transcendentals=0,
                bytes_accessed=int(bytes_accessed)),
        )(x2, wm1, wm2, wm3, bv1, bv2, bv3, m_hi, m_lo, s2, s3)

        # (C3, B*H3*W3) -> NCHW last feature map (matches torch feature_maps[-1]).
        return jnp.transpose(out.reshape(c3, b, h3, w3), (1, 0, 2, 3))

    # -------------------------- pure-JAX reference --------------------------
    def reference(self, x_nchw):
        x = jnp.transpose(x_nchw, (0, 2, 3, 1)).astype(jnp.float32)
        for (w, scale, bias), s in zip(self.raw_params, self.strides):
            y = lax.conv_general_dilated(
                x, w, window_strides=(s, s), padding=((1, 1), (1, 1)),
                dimension_numbers=("NHWC", "HWIO", "NHWC"))
            x = jnp.maximum(y * scale + bias, 0.0)
        return jnp.transpose(x, (0, 3, 1, 2))


if __name__ == "__main__":
    model = ImageBackbonePallas(in_chans=3, widths=(16, 32, 64), seed=42)

    x = jax.random.normal(jax.random.PRNGKey(0), (2, 3, 16, 16), jnp.float32)

    out = jax.jit(model.forward)(x)
    out = jax.block_until_ready(out)

    ref = model.reference(x)
    assert out.shape == (2, 64, 4, 4), out.shape
    max_err = float(jnp.max(jnp.abs(out - ref)))
    assert jnp.allclose(out, ref, atol=1e-3, rtol=1e-3), max_err

    print("KERNEL_OK")
</pallas_src>

<mosaic_0001>
module attributes {stable_mosaic.version = 11 : i64} {
  func.func @probe(%arg0: memref<8x128xf32, #tpu.memory_space<vmem>>, %arg1: memref<8x128xf32, #tpu.memory_space<vmem>>) attributes {dimension_semantics = [], scalar_prefetch = 0 : i64, scratch_operands = 0 : i64, tpu.core_type = #tpu.core_type<tc>} {
    %c0 = arith.constant 0 : index
    %c0_0 = arith.constant 0 : index
    %0 = vector.load %arg0[%c0, %c0_0] : memref<8x128xf32, #tpu.memory_space<vmem>>, vector<8x128xf32>
    %c1_i32 = arith.constant 1 : i32
    %1 = tpu.dynamic_rotate %0 by %c1_i32 dim 1 : vector<8x128xf32>, i32 -> vector<8x128xf32>
    %c0_1 = arith.constant 0 : index
    %c0_2 = arith.constant 0 : index
    %2 = vector.load %arg1[%c0_1, %c0_2] : memref<8x128xf32, #tpu.memory_space<vmem>>, vector<8x128xf32>
    tpu.vector_store %arg1[%c0_1, %c0_2], %1 {strides = array<i32>} : memref<8x128xf32, #tpu.memory_space<vmem>>, vector<8x128xf32>,
    return
  }
}

</mosaic_0001>

<llo_original>
// kernel: tpu_custom_call.1
$region0: #{tpu_custom_call.1}
  #allocation0 [shape = 'u32[]', space=smem, size = 0x4, offset = 0x4, fixed_abs, tag = 'smem constant byte address 0x4 - core index']
  #allocation1 [shape = 'u32[144,128]{1,0:T(1,128)}', space=vmem, size = 0x12000, scoped, tag = 'internal scratch']
  %s0 = inlined_call_operand.hbm [shape: f32[8,128], index: 0, kind: input, shape index: {}]
  %s1 = inlined_call_operand.hbm [shape: f32[8,128], index: 1, kind: output, shape index: {}]
  %s2 = sld [smem:[#allocation0]]
  $region18: #{tpu_custom_call.1} parent=0
    _
  %s4 = ssub.s32 1, %s2
  %s5 = scalar_select 0, %s4, %s2
  $region1: #{tpu_custom_call.1} parent=0
    #allocation2 [shape = 'u8[4096]{0}', space=vmem, size = 0x1000, scoped, tag = 'input window, operand 0, single buffered']
    #allocation3 [shape = 's32[1]{0}', space=sflag, size = 0x4, scoped, tag = 'scoped memory for tpu_custom_call.1']
    #allocation4 [shape = 's32[1]{0}', space=sflag, size = 0x4, scoped, tag = 'scoped memory for tpu_custom_call.1']
    #allocation5 [shape = 'u8[4096]{0}', space=vmem, size = 0x1000, scoped, tag = 'output window, operand 0, single buffered']
    %6 = vsyncpa [#allocation3], 0
    %7 = vsyncpa [#allocation4], 0
    // Predicated region
    $region2: #{tpu_custom_call.1} parent=1 // pred_check
      _
    $region3: #{tpu_custom_call.1} parent=1 // pred_check_branch
      %9 = sbr.rel (0) target = $region5
    $region4: #{tpu_custom_call.1} parent=1 // pred_region
      %s11 = ssub.s32 128, 128
      %12 = vsyncadd [#allocation3], %s11
      %s14 = sshll.u32 [#allocation2], 4
      %s15 = int_to_ptr.vmem [resolvable:$true] %s14
      %17 = dma.hbm_to_vmem [thread:$0]  %s0, 128, %s15, [#allocation3]
    $region5: #{tpu_custom_call.1} parent=1 // pred_fallthru
      _
    // Predicated region
    $region6: #{tpu_custom_call.1} parent=1 // pred_check
      _
    $region7: #{tpu_custom_call.1} parent=1 // pred_check_branch
      %19 = sbr.rel (0) target = $region9
    $region8: #{tpu_custom_call.1} parent=1 // pred_region
      %20 = dma.done [#allocation3], 128
    $region9: #{tpu_custom_call.1} parent=1 // pred_fallthru
      _
    %v21 = vld [vmem:[#allocation2] sm:$0xff]
    %22 = vrot.lane.b32.xlu0 %v21, 1
    %v23 = vpop.permute.xlu0 %22
    %24 = vst [vmem:[#allocation5] sm:$0xff] %v23
    // Predicated region
    $region10: #{tpu_custom_call.1} parent=1 // pred_check
      _
    $region11: #{tpu_custom_call.1} parent=1 // pred_check_branch
      %26 = sbr.rel (0) target = $region13
    $region12: #{tpu_custom_call.1} parent=1 // pred_region
      %s28 = ssub.s32 128, 128
      %29 = vsyncadd [#allocation4], %s28
      %s31 = sshll.u32 [#allocation5], 4
      %s32 = int_to_ptr.vmem [resolvable:$true] %s31
      %34 = dma.vmem_to_hbm [thread:$0]  %s32, 128, %s1, [#allocation4]
    $region13: #{tpu_custom_call.1} parent=1 // pred_fallthru
      _
    // Predicated region
    $region14: #{tpu_custom_call.1} parent=1 // pred_check
      _
    $region15: #{tpu_custom_call.1} parent=1 // pred_check_branch
      %36 = sbr.rel (0) target = $region17
    $region16: #{tpu_custom_call.1} parent=1 // pred_region
      %37 = dma.done [#allocation4], 128
    $region17: #{tpu_custom_call.1} parent=1 // pred_fallthru
      _
    %38 = vsyncpa [#allocation3], 1
    %39 = vsyncpa [#allocation4], 1

</llo_original>
